<compile_context>
chip_gen: v7x
topology: tpu7x:2x2x1
jax: 0.10.0
libtpu: 0.0.40
codegen_flags: <defaults>
</compile_context>

<pallas_src>
import functools
from math import pi

import jax
import jax.numpy as jnp
from jax.experimental import pallas as pl
from jax.experimental.pallas import tpu as pltpu


# ---------------------------------------------------------------------------
# Morlet wavelet + filter bank (plain JAX: O*K elements, trivial).
# ---------------------------------------------------------------------------
def _morlet(p):
    C = pi ** 0.25
    return C * jnp.exp(-(p * p) / 2.0) * jnp.cos(2.0 * pi * p)


def _round_up(x, m):
    return ((x + m - 1) // m) * m


def _build_filters(a, b, K):
    """Morlet filter bank (O, K) -- exactly the PyTorch forward math."""
    half = int(K / 2)
    t_right = jnp.linspace(0.0, K / 2 - 1, half, dtype=jnp.float32)
    t_left = jnp.linspace(-(K / 2) + 1, -1.0, half, dtype=jnp.float32)
    shift = b / a                                   # (O, 1)
    left = _morlet(t_left[None, :] - shift)         # (O, K/2)
    right = _morlet(t_right[None, :] - shift)       # (O, K/2)
    return jnp.concatenate([left, right], axis=1)   # (O, K)


# ---------------------------------------------------------------------------
# Conv1d kernel: grid = (batch blocks, lane-aligned time tiles).
# ---------------------------------------------------------------------------
def conv1d_kernel(x_ref, w_ref, o_ref, *, K, Tt):
    # x_ref: (B, 1, L_x) zero-padded waveform rows, resident across time tiles
    # w_ref: (O, K)      Morlet filter bank, resident across the whole grid
    # o_ref: (B, O, Tt)  lane-aligned output tile
    t = pl.program_id(1)
    base = pl.multiple_of(t * Tt, 128)

    if K <= 32:
        # Small K: load filter + x window once, static-unrolled VPU MAC loop.
        w = w_ref[...]                                # (O, K)
        xw = x_ref[:, 0, pl.ds(base, Tt + K - 1)]     # (B, Tt + K - 1)
        acc = xw[:, 0:Tt][:, None, :] * w[None, :, 0:1]            # (B, O, Tt)
        for k in range(1, K):
            acc = acc + xw[:, k:k + Tt][:, None, :] * w[None, :, k:k + 1]
    else:
        # Large K: bounded unroll keeps vreg pressure / compile time in check.
        # (For K >~ 64 and O >= 64 an MXU im2col matmul would be faster still.)
        def body(k, acc):
            xk = x_ref[:, 0, pl.ds(base + k, Tt)]     # (B, Tt)
            wk = w_ref[:, pl.ds(k, 1)]                # (O, 1)
            return acc + xk[:, None, :] * wk[None, :, :]

        acc = jax.lax.fori_loop(0, K, body,
                                jnp.zeros(o_ref.shape, jnp.float32), unroll=4)

    o_ref[...] = acc.astype(o_ref.dtype)


# ---------------------------------------------------------------------------
# Forward wrapper (mirrors F.conv1d(waveforms, filters, stride=1, padding=1)).
# ---------------------------------------------------------------------------
def morlet_fast_forward(waveforms, a, b, K, O):
    N, C, L = waveforms.shape
    assert C == 1, "in_channels must be 1"
    pad = 1
    T_out = L + 2 * pad - K + 1                      # stride=1, dilation=1

    filt = _build_filters(a, b, K)                   # (O, K), plain JAX

    # ---- tiling choices -------------------------------------------------
    Tt = 512 if T_out > 512 else _round_up(T_out, 128)   # lane-aligned time tile
    T_pad = _round_up(T_out, Tt)
    L_x = T_pad + K - 1                              # padded row length (covers all taps)
    B = min(N, 8)                                    # batch block per grid step

    def _blk_bytes(B_):                              # double-buffered block footprint
        return 2 * 4 * (B_ * L_x + B_ * O * Tt + O * K)

    # stay well inside v7x's 64 MiB physical VMEM (and v5e/v6e scoped defaults)
    while B > 1 and _blk_bytes(B) > 32 * 1024 * 1024:
        B //= 2
    N_pad = _round_up(N, B)

    # Single pad pass: conv padding=1 on the left, conv+alignment pad on the right,
    # and batch round-up (extra rows/columns are sliced off after the kernel).
    x_ext = jnp.pad(waveforms, ((0, N_pad - N), (0, 0), (pad, L_x - L - pad)))

    vmem_limit = int(min(max(_blk_bytes(B) + (8 << 20), 32 << 20), 48 << 20))

    out = pl.pallas_call(
        functools.partial(conv1d_kernel, K=K, Tt=Tt),
        out_shape=jax.ShapeDtypeStruct((N_pad, O, T_pad), jnp.float32),
        grid=(N_pad // B, T_pad // Tt),
        in_specs=[
            # full padded row per batch block; index_map ignores t -> stays resident
            pl.BlockSpec((B, 1, L_x), lambda n, t: (n, 0, 0)),
            pl.BlockSpec((O, K), lambda n, t: (0, 0)),
        ],
        out_specs=pl.BlockSpec((B, O, Tt), lambda n, t: (n, 0, t)),
        compiler_params=pltpu.CompilerParams(
            dimension_semantics=("parallel", "parallel"),
            vmem_limit_bytes=vmem_limit,
        ),
    )(x_ext, filt)

    return out[:N, :, :T_out]


# ---------------------------------------------------------------------------
# Module wrapper (mirrors the PyTorch Morlet_fast module).
# ---------------------------------------------------------------------------
class MorletFastPallas:
    def __init__(self, out_channels, kernel_size, in_channels=1):
        if in_channels != 1:
            raise ValueError(
                "MexhConv only support one input channel (here, in_channels = %i)"
                % in_channels
            )
        self.out_channels = out_channels
        self.kernel_size = kernel_size - 1
        if kernel_size % 2 == 0:
            self.kernel_size = self.kernel_size + 1
        # Deterministic parameter init, exactly as in the PyTorch __init__.
        self.a_ = jnp.linspace(1.0, 10.0, out_channels, dtype=jnp.float32).reshape(-1, 1)
        self.b_ = jnp.linspace(0.0, 10.0, out_channels, dtype=jnp.float32).reshape(-1, 1)

    def __call__(self, waveforms):
        return morlet_fast_forward(waveforms, self.a_, self.b_,
                                   self.kernel_size, self.out_channels)


# ---------------------------------------------------------------------------
# Pure-JAX reference (same math) used only to sanity-check the kernel.
# ---------------------------------------------------------------------------
def reference_forward(a, b, K, waveforms):
    filt = _build_filters(a, b, K)                              # (O, K)
    x_pad = jnp.pad(waveforms, ((0, 0), (0, 0), (1, 1)))
    T_out = x_pad.shape[-1] - K + 1
    cols = jnp.stack([x_pad[:, 0, k:k + T_out] for k in range(K)], axis=-1)  # (N,T,K)
    return jnp.einsum("ntk,ok->not", cols, filt)


if __name__ == "__main__":
    key = jax.random.PRNGKey(0)
    N, L = 2, 16
    out_channels, kernel_size = 8, 6   # effective kernel length K = 6 (even)

    waveforms = jax.random.normal(key, (N, 1, L), dtype=jnp.float32)

    mod = MorletFastPallas(out_channels=out_channels, kernel_size=kernel_size)
    y = jax.block_until_ready(mod(waveforms))

    K = mod.kernel_size
    T_out = L + 2 - K + 1
    assert y.shape == (N, out_channels, T_out), y.shape

    ref = reference_forward(mod.a_, mod.b_, K, waveforms)
    assert bool(jnp.allclose(y, ref, atol=1e-5, rtol=1e-5)), "mismatch vs reference"

    print("KERNEL_OK")
</pallas_src>

<mosaic_0001>
module attributes {stable_mosaic.version = 11 : i64} {
  func.func @conv1d_kernel(%arg0: i32, %arg1: i32, %arg2: memref<2x1x133xf32, #tpu.memory_space<vmem>>, %arg3: memref<8x6xf32, #tpu.memory_space<vmem>>, %arg4: memref<2x8x128xf32, #tpu.memory_space<vmem>>) attributes {dimension_semantics = [#tpu.dimension_semantics<parallel>, #tpu.dimension_semantics<parallel>], iteration_bounds = array<i64: 1, 1>, scalar_prefetch = 0 : i64, scratch_operands = 0 : i64, tpu.core_type = #tpu.core_type<tc>, window_params = [{transform_indices = @transform_0, window_bounds = array<i64: 2, 1, 133>}, {pipeline_mode = #tpu.pipeline_mode<synchronous>, transform_indices = @transform_1, window_bounds = array<i64: 8, 6>}, {transform_indices = @transform_2, window_bounds = array<i64: 2, 8, 128>}]} {
    %c128_i32 = arith.constant 128 : i32
    %0 = arith.muli %arg1, %c128_i32 : i32
    %1 = tpu.assume_multiple %0, 128 : i32
    %c0 = arith.constant 0 : index
    %c0_0 = arith.constant 0 : index
    %2 = vector.load %arg3[%c0, %c0_0] : memref<8x6xf32, #tpu.memory_space<vmem>>, vector<8x6xf32>
    %c0_1 = arith.constant 0 : index
    %c0_2 = arith.constant 0 : index
    %3 = arith.index_cast %1 : i32 to index
    %4 = vector.load %arg2[%c0_1, %c0_2, %3] : memref<2x1x133xf32, #tpu.memory_space<vmem>>, vector<2x1x133xf32>
    %5 = vector.shape_cast %4 : vector<2x1x133xf32> to vector<2x133xf32>
    %6 = vector.extract_strided_slice %5 {offsets = [0, 0], sizes = [2, 128], strides = [1, 1]} : vector<2x133xf32> to vector<2x128xf32>
    %7 = vector.shape_cast %6 : vector<2x128xf32> to vector<2x1x128xf32>
    %8 = vector.extract_strided_slice %2 {offsets = [0, 0], sizes = [8, 1], strides = [1, 1]} : vector<8x6xf32> to vector<8x1xf32>
    %9 = vector.shape_cast %8 : vector<8x1xf32> to vector<1x8x1xf32>
    %10 = vector.broadcast %7 : vector<2x1x128xf32> to vector<2x8x128xf32>
    %11 = vector.broadcast %9 : vector<1x8x1xf32> to vector<2x8x128xf32>
    %12 = arith.mulf %10, %11 : vector<2x8x128xf32>
    %13 = vector.extract_strided_slice %5 {offsets = [0, 1], sizes = [2, 128], strides = [1, 1]} : vector<2x133xf32> to vector<2x128xf32>
    %14 = vector.shape_cast %13 : vector<2x128xf32> to vector<2x1x128xf32>
    %15 = vector.extract_strided_slice %2 {offsets = [0, 1], sizes = [8, 1], strides = [1, 1]} : vector<8x6xf32> to vector<8x1xf32>
    %16 = vector.shape_cast %15 : vector<8x1xf32> to vector<1x8x1xf32>
    %17 = vector.broadcast %14 : vector<2x1x128xf32> to vector<2x8x128xf32>
    %18 = vector.broadcast %16 : vector<1x8x1xf32> to vector<2x8x128xf32>
    %19 = arith.mulf %17, %18 : vector<2x8x128xf32>
    %20 = arith.addf %12, %19 : vector<2x8x128xf32>
    %21 = vector.extract_strided_slice %5 {offsets = [0, 2], sizes = [2, 128], strides = [1, 1]} : vector<2x133xf32> to vector<2x128xf32>
    %22 = vector.shape_cast %21 : vector<2x128xf32> to vector<2x1x128xf32>
    %23 = vector.extract_strided_slice %2 {offsets = [0, 2], sizes = [8, 1], strides = [1, 1]} : vector<8x6xf32> to vector<8x1xf32>
    %24 = vector.shape_cast %23 : vector<8x1xf32> to vector<1x8x1xf32>
    %25 = vector.broadcast %22 : vector<2x1x128xf32> to vector<2x8x128xf32>
    %26 = vector.broadcast %24 : vector<1x8x1xf32> to vector<2x8x128xf32>
    %27 = arith.mulf %25, %26 : vector<2x8x128xf32>
    %28 = arith.addf %20, %27 : vector<2x8x128xf32>
    %29 = vector.extract_strided_slice %5 {offsets = [0, 3], sizes = [2, 128], strides = [1, 1]} : vector<2x133xf32> to vector<2x128xf32>
    %30 = vector.shape_cast %29 : vector<2x128xf32> to vector<2x1x128xf32>
    %31 = vector.extract_strided_slice %2 {offsets = [0, 3], sizes = [8, 1], strides = [1, 1]} : vector<8x6xf32> to vector<8x1xf32>
    %32 = vector.shape_cast %31 : vector<8x1xf32> to vector<1x8x1xf32>
    %33 = vector.broadcast %30 : vector<2x1x128xf32> to vector<2x8x128xf32>
    %34 = vector.broadcast %32 : vector<1x8x1xf32> to vector<2x8x128xf32>
    %35 = arith.mulf %33, %34 : vector<2x8x128xf32>
    %36 = arith.addf %28, %35 : vector<2x8x128xf32>
    %37 = vector.extract_strided_slice %5 {offsets = [0, 4], sizes = [2, 128], strides = [1, 1]} : vector<2x133xf32> to vector<2x128xf32>
    %38 = vector.shape_cast %37 : vector<2x128xf32> to vector<2x1x128xf32>
    %39 = vector.extract_strided_slice %2 {offsets = [0, 4], sizes = [8, 1], strides = [1, 1]} : vector<8x6xf32> to vector<8x1xf32>
    %40 = vector.shape_cast %39 : vector<8x1xf32> to vector<1x8x1xf32>
    %41 = vector.broadcast %38 : vector<2x1x128xf32> to vector<2x8x128xf32>
    %42 = vector.broadcast %40 : vector<1x8x1xf32> to vector<2x8x128xf32>
    %43 = arith.mulf %41, %42 : vector<2x8x128xf32>
    %44 = arith.addf %36, %43 : vector<2x8x128xf32>
    %45 = vector.extract_strided_slice %5 {offsets = [0, 5], sizes = [2, 128], strides = [1, 1]} : vector<2x133xf32> to vector<2x128xf32>
    %46 = vector.shape_cast %45 : vector<2x128xf32> to vector<2x1x128xf32>
    %47 = vector.extract_strided_slice %2 {offsets = [0, 5], sizes = [8, 1], strides = [1, 1]} : vector<8x6xf32> to vector<8x1xf32>
    %48 = vector.shape_cast %47 : vector<8x1xf32> to vector<1x8x1xf32>
    %49 = vector.broadcast %46 : vector<2x1x128xf32> to vector<2x8x128xf32>
    %50 = vector.broadcast %48 : vector<1x8x1xf32> to vector<2x8x128xf32>
    %51 = arith.mulf %49, %50 : vector<2x8x128xf32>
    %52 = arith.addf %44, %51 : vector<2x8x128xf32>
    %c0_3 = arith.constant 0 : index
    %c0_4 = arith.constant 0 : index
    %c0_5 = arith.constant 0 : index
    %53 = vector.load %arg4[%c0_3, %c0_4, %c0_5] : memref<2x8x128xf32, #tpu.memory_space<vmem>>, vector<2x8x128xf32>
    tpu.vector_store %arg4[%c0_3, %c0_4, %c0_5], %52 {strides = array<i32>} : memref<2x8x128xf32, #tpu.memory_space<vmem>>, vector<2x8x128xf32>,
    return
  }
  func.func @transform_0(%arg0: i32, %arg1: i32) -> (i32, i32, i32) {
    %c0_i32 = arith.constant 0 : i32
    %c0_i32_0 = arith.constant 0 : i32
    %c0_i32_1 = arith.constant 0 : i32
    return %arg0, %c0_i32, %c0_i32_0 : i32, i32, i32
  }
  func.func @transform_1(%arg0: i32, %arg1: i32) -> (i32, i32) {
    %c0_i32 = arith.constant 0 : i32
    %c0_i32_0 = arith.constant 0 : i32
    %c0_i32_1 = arith.constant 0 : i32
    return %c0_i32, %c0_i32_0 : i32, i32
  }
  func.func @transform_2(%arg0: i32, %arg1: i32) -> (i32, i32, i32) {
    %c0_i32 = arith.constant 0 : i32
    %c0_i32_0 = arith.constant 0 : i32
    return %arg0, %c0_i32, %arg1 : i32, i32, i32
  }
}

</mosaic_0001>

<llo_original>
// kernel: tpu_custom_call.1
$region0: #{tpu_custom_call.1}
  #allocation0 [shape = 'u32[]', space=smem, size = 0x4, offset = 0x4, fixed_abs, tag = 'smem constant byte address 0x4 - core index']
  #allocation1 [shape = 'u32[144,128]{1,0:T(1,128)}', space=vmem, size = 0x12000, scoped, tag = 'internal scratch']
  %s0 = inlined_call_operand.hbm [shape: f32[2,1,133], index: 0, kind: input, shape index: {}]
  %s1 = inlined_call_operand.hbm [shape: f32[8,6], index: 1, kind: input, shape index: {}]
  %s2 = inlined_call_operand.hbm [shape: f32[2,8,128], index: 2, kind: output, shape index: {}]
  %s3 = sld [smem:[#allocation0]]
  $region26: #{tpu_custom_call.1} parent=0
    _
  %s5 = ssub.s32 1, %s3
  %s6 = scalar_select 0, %s5, %s3
  $region1: #{tpu_custom_call.1} parent=0
    #allocation2 [shape = 'u8[2048]{0}', space=vmem, size = 0x800, scoped, tag = 'input window, operand 0, single buffered']
    #allocation3 [shape = 's32[1]{0}', space=sflag, size = 0x4, scoped, tag = 'scoped memory for tpu_custom_call.1']
    #allocation4 [shape = 's32[1]{0}', space=sflag, size = 0x4, scoped, tag = 'scoped memory for tpu_custom_call.1']
    #allocation5 [shape = 'u8[4096]{0}', space=vmem, size = 0x1000, scoped, tag = 'input window, operand 1, single buffered']
    #allocation6 [shape = 's32[1]{0}', space=sflag, size = 0x4, scoped, tag = 'scoped memory for tpu_custom_call.1']
    #allocation7 [shape = 'u8[8192]{0}', space=vmem, size = 0x2000, scoped, tag = 'output window, operand 0, single buffered']
    %7 = vsyncpa [#allocation3], 0
    %8 = vsyncpa [#allocation6], 0
    %9 = vsyncpa [#allocation4], 0
    // Predicated region
    $region2: #{tpu_custom_call.1} parent=1 // pred_check
      _
    $region3: #{tpu_custom_call.1} parent=1 // pred_check_branch
      %11 = sbr.rel (0) target = $region5
    $region4: #{tpu_custom_call.1} parent=1 // pred_region
      %s13 = ssub.s32 64, 64
      %14 = vsyncadd [#allocation3], %s13
      %s15 = sshll.u32 [#allocation2], 4
      %s16 = int_to_ptr.vmem [resolvable:$true] %s15
      %21 = dma.hbm_to_vmem [thread:$0]  %s0, 64, %s16, [#allocation3], 32, 32, 2
    $region5: #{tpu_custom_call.1} parent=1 // pred_fallthru
      _
    // Predicated region
    $region6: #{tpu_custom_call.1} parent=1 // pred_check
      _
    $region7: #{tpu_custom_call.1} parent=1 // pred_check_branch
      %23 = sbr.rel (0) target = $region9
    $region8: #{tpu_custom_call.1} parent=1 // pred_region
      %s25 = ssub.s32 128, 128
      %26 = vsyncadd [#allocation6], %s25
      %s28 = sshll.u32 [#allocation5], 4
      %s29 = int_to_ptr.vmem [resolvable:$true] %s28
      %31 = dma.hbm_to_vmem [thread:$0]  %s1, 128, %s29, [#allocation6]
    $region9: #{tpu_custom_call.1} parent=1 // pred_fallthru
      _
    // Predicated region
    $region10: #{tpu_custom_call.1} parent=1 // pred_check
      _
    $region11: #{tpu_custom_call.1} parent=1 // pred_check_branch
      %33 = sbr.rel (0) target = $region13
    $region12: #{tpu_custom_call.1} parent=1 // pred_region
      %34 = dma.done [#allocation3], 64
    $region13: #{tpu_custom_call.1} parent=1 // pred_fallthru
      _
    // Predicated region
    $region14: #{tpu_custom_call.1} parent=1 // pred_check
      _
    $region15: #{tpu_custom_call.1} parent=1 // pred_check_branch
      %36 = sbr.rel (0) target = $region17
    $region16: #{tpu_custom_call.1} parent=1 // pred_region
      %37 = dma.done [#allocation6], 128
    $region17: #{tpu_custom_call.1} parent=1 // pred_fallthru
      _
    %s38 = smul.u32 0, 128
    %v39 = vld [vmem:[#allocation5] sm:$0xff]
    %s40 = sshra.s32 %s38, 7
    %s41 = sand.u32 %s38, 127
    %s42 = scalar_lea.vmem [#allocation2], %s40
    %v43 = vld [vmem:[%s42] sm:$0x3]
    %v44 = vld [vmem:[%s42 + $0x2] sm:$0x3]
    %v47 = vlaneseq
    %v48 = vshrl.u32 %v47, 7
    %v49 = vsub.s32 0, %v48
    %v50 = vrot.slane %v43, %v49
    %v51 = vlaneseq
    %v52 = vshrl.u32 %v51, 7
    %v53 = vsub.s32 0, %v52
    %v54 = vrot.slane %v44, %v53
    %58 = vset.pattern.permute.xlu0 0
    %59 = vperm.xlu0 %58, %v39
    %v60 = vpop.permute.xlu0 %59
    %v62 = vmul.f32 %v50, %v60
    %v63 = vmul.f32 %v54, %v60
    %v64 = vlaneseq
    %v65 = vshrl.u32 %v64, 7
    %v66 = vsub.s32 1, %v65
    %v67 = vrot.slane %v43, %v66
    %v68 = vlaneseq
    %v69 = vshrl.u32 %v68, 7
    %v70 = vsub.s32 1, %v69
    %v71 = vrot.slane %v44, %v70
    %74 = vset.pattern.permute.xlu0 1
    %75 = vperm.xlu0 %74, %v39
    %v76 = vpop.permute.xlu0 %75
    %v78 = vmul.f32 %v50, %v76
    %v79 = vmul.f32 %v67, %v76
    %v80 = vmul.f32 %v54, %v76
    %v81 = vmul.f32 %v71, %v76
    %86 = vrot.lane.b32.xlu0 %v78, 127
    %v87 = vpop.permute.xlu0 %86
    %88 = vrot.lane.b32.xlu0 %v79, 127
    %v89 = vpop.permute.xlu0 %88
    %90 = vrot.lane.b32.xlu0 %v80, 127
    %v91 = vpop.permute.xlu0 %90
    %92 = vrot.lane.b32.xlu0 %v81, 127
    %v93 = vpop.permute.xlu0 %92
    %vm94 = vcmask 1039360
    %v95 = vsel %vm94, %v87, %v89
    %v96 = vsel %vm94, %v91, %v93
    %v99 = vadd.f32 %v62, %v95
    %v100 = vadd.f32 %v63, %v96
    %101 = vset.pattern.permute.xlu0 2
    %102 = vperm.xlu0 %101, %v39
    %v103 = vpop.permute.xlu0 %102
    %v105 = vmul.f32 %v50, %v103
    %v106 = vmul.f32 %v67, %v103
    %v107 = vmul.f32 %v54, %v103
    %v108 = vmul.f32 %v71, %v103
    %113 = vrot.lane.b32.xlu0 %v105, 126
    %v114 = vpop.permute.xlu0 %113
    %115 = vrot.lane.b32.xlu0 %v106, 126
    %v116 = vpop.permute.xlu0 %115
    %117 = vrot.lane.b32.xlu0 %v107, 126
    %v118 = vpop.permute.xlu0 %117
    %119 = vrot.lane.b32.xlu0 %v108, 126
    %v120 = vpop.permute.xlu0 %119
    %vm121 = vcmask 1031168
    %v122 = vsel %vm121, %v114, %v116
    %v123 = vsel %vm121, %v118, %v120
    %v126 = vadd.f32 %v99, %v122
    %v127 = vadd.f32 %v100, %v123
    %128 = vset.pattern.permute.xlu0 3
    %129 = vperm.xlu0 %128, %v39
    %v130 = vpop.permute.xlu0 %129
    %v132 = vmul.f32 %v50, %v130
    %v133 = vmul.f32 %v67, %v130
    %v134 = vmul.f32 %v54, %v130
    %v135 = vmul.f32 %v71, %v130
    %140 = vrot.lane.b32.xlu0 %v132, 125
    %v141 = vpop.permute.xlu0 %140
    %142 = vrot.lane.b32.xlu0 %v133, 125
    %v143 = vpop.permute.xlu0 %142
    %144 = vrot.lane.b32.xlu0 %v134, 125
    %v145 = vpop.permute.xlu0 %144
    %146 = vrot.lane.b32.xlu0 %v135, 125
    %v147 = vpop.permute.xlu0 %146
    %vm148 = vcmask 1022976
    %v149 = vsel %vm148, %v141, %v143
    %v150 = vsel %vm148, %v145, %v147
    %v153 = vadd.f32 %v126, %v149
    %v154 = vadd.f32 %v127, %v150
    %155 = vset.pattern.permute.xlu0 4
    %156 = vperm.xlu0 %155, %v39
    %v157 = vpop.permute.xlu0 %156
    %v159 = vmul.f32 %v50, %v157
    %v160 = vmul.f32 %v67, %v157
    %v161 = vmul.f32 %v54, %v157
    %v162 = vmul.f32 %v71, %v157
    %167 = vrot.lane.b32.xlu0 %v159, 124
    %v168 = vpop.permute.xlu0 %167
    %169 = vrot.lane.b32.xlu0 %v160, 124
    %v170 = vpop.permute.xlu0 %169
    %171 = vrot.lane.b32.xlu0 %v161, 124
    %v172 = vpop.permute.xlu0 %171
    %173 = vrot.lane.b32.xlu0 %v162, 124
    %v174 = vpop.permute.xlu0 %173
    %vm175 = vcmask 1014784
    %v176 = vsel %vm175, %v168, %v170
    %v177 = vsel %vm175, %v172, %v174
    %v180 = vadd.f32 %v153, %v176
    %v181 = vadd.f32 %v154, %v177
    %182 = vset.pattern.permute.xlu0 5
    %183 = vperm.xlu0 %182, %v39
    %v184 = vpop.permute.xlu0 %183
    %v186 = vmul.f32 %v50, %v184
    %v187 = vmul.f32 %v67, %v184
    %v188 = vmul.f32 %v54, %v184
    %v189 = vmul.f32 %v71, %v184
    %194 = vrot.lane.b32.xlu0 %v186, 123
    %v195 = vpop.permute.xlu0 %194
    %196 = vrot.lane.b32.xlu0 %v187, 123
    %v197 = vpop.permute.xlu0 %196
    %198 = vrot.lane.b32.xlu0 %v188, 123
    %v199 = vpop.permute.xlu0 %198
    %200 = vrot.lane.b32.xlu0 %v189, 123
    %v201 = vpop.permute.xlu0 %200
    %vm202 = vcmask 1006592
    %v203 = vsel %vm202, %v195, %v197
    %v204 = vsel %vm202, %v199, %v201
    %v207 = vadd.f32 %v180, %v203
    %v208 = vadd.f32 %v181, %v204
    %209 = vst [vmem:[#allocation7] sm:$0xff] %v207
    %210 = vst [vmem:[#allocation7 + $0x8] sm:$0xff] %v208
    // Predicated region
    $region18: #{tpu_custom_call.1} parent=1 // pred_check
      _
    $region19: #{tpu_custom_call.1} parent=1 // pred_check_branch
      %212 = sbr.rel (0) target = $region21
    $region20: #{tpu_custom_call.1} parent=1 // pred_region
      %s214 = ssub.s32 256, 256
      %215 = vsyncadd [#allocation4], %s214
      %s216 = sshll.u32 [#allocation7], 4
      %s217 = int_to_ptr.vmem [resolvable:$true] %s216
      %222 = dma.vmem_to_hbm [thread:$0]  %s217, 256, %s2, [#allocation4], 128, 128, 8
    $region21: #{tpu_custom_call.1} parent=1 // pred_fallthru
      _
    // Predicated region
    $region22: #{tpu_custom_call.1} parent=1 // pred_check
      _
    $region23: #{tpu_custom_call.1} parent=1 // pred_check_branch
      %224 = sbr.rel (0) target = $region25
    $region24: #{tpu_custom_call.1} parent=1 // pred_region
      %225 = dma.done [#allocation4], 256
    $region25: #{tpu_custom_call.1} parent=1 // pred_fallthru
      _
    %226 = vsyncpa [#allocation3], 1
    %227 = vsyncpa [#allocation6], 1
    %228 = vsyncpa [#allocation4], 1

</llo_original>
